<compile_context>
chip_gen: v7x
topology: tpu7x:2x2x1
jax: 0.10.0
libtpu: 0.0.40
codegen_flags: <defaults>
</compile_context>

<pallas_src>
import functools

import jax
import jax.numpy as jnp
from jax.experimental import pallas as pl
from jax.experimental.pallas import tpu as pltpu

HIDDEN_UNITS = 384


def _feature_kernel(x_ref, inv_std_ref, shift_ref, w1_ref, b1_ref, w2_ref,
                    b2_ref, o_ref, *, hidden_bf16):
    # safe_normalize_state with the reciprocal hoisted to the host:
    #   (x - mean) / (std + 1e-8)  ==  x * inv_std + shift
    xn = jnp.clip(x_ref[...] * inv_std_ref[...] + shift_ref[...], -5.0, 5.0)

    # fc1: bf16 operands on the MXU, f32 accumulation.
    h1 = jnp.dot(xn.astype(jnp.bfloat16), w1_ref[...],
                 preferred_element_type=jnp.float32)
    if hidden_bf16:
        # v7x path: bias-add + ReLU in packed bf16 (b1 is bf16), feeding fc2
        # directly — removes a separate f32 downcast pass over [block_b, 384].
        h1 = jnp.maximum(h1.astype(jnp.bfloat16) + b1_ref[...],
                         jnp.bfloat16(0.0))
    else:
        # v5e/v6e path: bias/relu in f32 (no bf16 VPU on v5e), then downcast.
        h1 = jnp.maximum(h1 + b1_ref[...], 0.0).astype(jnp.bfloat16)

    # fc2 + relu (f32 accumulation, f32 bias/relu).
    h2 = jnp.dot(h1, w2_ref[...], preferred_element_type=jnp.float32)
    h2 = jnp.maximum(h2 + b2_ref[...], 0.0)

    o_ref[...] = h2.astype(o_ref.dtype)


@functools.partial(jax.jit,
                   static_argnames=("block_b", "out_dtype", "hidden_bf16"))
def _forward(x, state_mean, state_std, w1, b1, w2, b2, *, block_b, out_dtype,
             hidden_bf16):
    B, D = x.shape
    H = w1.shape[1]
    n_blocks = pl.cdiv(B, block_b)   # ragged final block handled by Pallas

    # Host-side prep: fold the divide into a multiply-add, bf16 weights.
    inv_std = (1.0 / (state_std.astype(jnp.float32) + 1e-8))
    shift = (-state_mean.astype(jnp.float32) * inv_std)
    inv_std2 = inv_std.reshape(1, D)
    shift2 = shift.reshape(1, D)
    w1_bf = w1.astype(jnp.bfloat16)
    w2_bf = w2.astype(jnp.bfloat16)
    b1_2 = b1.reshape(1, H).astype(jnp.bfloat16 if hidden_bf16
                                   else jnp.float32)
    b2_2 = b2.reshape(1, H).astype(jnp.float32)

    kernel = functools.partial(_feature_kernel, hidden_bf16=hidden_bf16)

    return pl.pallas_call(
        kernel,
        out_shape=jax.ShapeDtypeStruct((B, H), out_dtype),
        grid_spec=pltpu.PrefetchScalarGridSpec(
            num_scalar_prefetch=0,
            grid=(n_blocks,),
            in_specs=[
                pl.BlockSpec((block_b, D), lambda i: (i, 0)),   # x tile
                pl.BlockSpec((1, D), lambda i: (0, 0)),         # inv_std
                pl.BlockSpec((1, D), lambda i: (0, 0)),         # shift
                pl.BlockSpec((D, H), lambda i: (0, 0)),         # w1 (bf16)
                pl.BlockSpec((1, H), lambda i: (0, 0)),         # b1
                pl.BlockSpec((H, H), lambda i: (0, 0)),         # w2 (bf16)
                pl.BlockSpec((1, H), lambda i: (0, 0)),         # b2
            ],
            out_specs=pl.BlockSpec((block_b, H), lambda i: (i, 0)),
        ),
        compiler_params=pltpu.CompilerParams(
            dimension_semantics=("parallel",)),
    )(x, inv_std2, shift2, w1_bf, b1_2, w2_bf, b2_2)


def _is_v7x():
    try:
        return "v7" in jax.devices()[0].device_kind.lower()
    except Exception:
        return False


def _pick_block_b(B):
    """Batch-tile heuristic.

    * B <= 256: one full-batch tile (small-batch latency path).
    * B > 256: at least 2 grid steps with an EVEN step count so v7x's two
      TensorCores split evenly (harmless / mildly helpful on v5e/v6e, where
      2-4 steps also enable DMA/compute overlap); block_b is a multiple of 8
      and capped at 1024 to stay inside v7x's scoped VMEM.
    """
    if B <= 256:
        return B
    n = max(2, pl.cdiv(B, 512))
    if n % 2:
        n += 1
    block_b = -(-B // n)                    # ceil(B / n)
    block_b = ((block_b + 7) // 8) * 8      # multiple of 8 (sublane tiling)
    return min(block_b, 1024)


def exploratory_feature_extractor(x, state_mean, state_std, w1, b1, w2, b2,
                                  block_b=None, out_dtype=jnp.float32,
                                  hidden_bf16=None):
    """x: [B, state_dim] float32 -> [B, HIDDEN_UNITS].

    out_dtype defaults to f32 (module semantics); pass jnp.bfloat16 to halve
    the HBM writeback (the dominant cost) when downstream accepts bf16.
    """
    B = x.shape[0]
    if block_b is None:
        block_b = _pick_block_b(B)
    if hidden_bf16 is None:
        hidden_bf16 = _is_v7x()
    return _forward(x, state_mean, state_std, w1, b1, w2, b2,
                    block_b=block_b, out_dtype=out_dtype,
                    hidden_bf16=bool(hidden_bf16))


def init_params(key, state_dim, hidden=HIDDEN_UNITS):
    """Deterministic init mirroring the PyTorch module's _init_weights:
    xavier_uniform_ with gain=2.0 on weights, uniform(-0.1, 0.1) on biases.
    Weights are stored [in, out] so the kernel computes x @ W."""
    k1, k2, k3, k4 = jax.random.split(key, 4)

    def xavier_uniform(k, fan_in, fan_out, gain):
        limit = gain * jnp.sqrt(6.0 / (fan_in + fan_out))
        return jax.random.uniform(k, (fan_in, fan_out), jnp.float32,
                                  -limit, limit)

    w1 = xavier_uniform(k1, state_dim, hidden, gain=2.0)
    b1 = jax.random.uniform(k2, (hidden,), jnp.float32, -0.1, 0.1)
    w2 = xavier_uniform(k3, hidden, hidden, gain=2.0)
    b2 = jax.random.uniform(k4, (hidden,), jnp.float32, -0.1, 0.1)

    state_mean = jnp.zeros((state_dim,), jnp.float32)   # registered buffers
    state_std = jnp.ones((state_dim,), jnp.float32)
    return state_mean, state_std, w1, b1, w2, b2


def reference_forward(x, state_mean, state_std, w1, b1, w2, b2):
    xn = jnp.clip((x - state_mean) / (state_std + 1e-8), -5.0, 5.0)
    h1 = jnp.maximum(xn @ w1 + b1, 0.0)
    h2 = jnp.maximum(h1 @ w2 + b2, 0.0)
    return h2


if __name__ == "__main__":
    key = jax.random.PRNGKey(0)
    kx, kp = jax.random.split(key)

    batch = 8
    state_dim = 16  # small synthetic state dimension

    x = jax.random.normal(kx, (batch, state_dim), jnp.float32)
    params = init_params(kp, state_dim)

    # 1) Single-tile path (B <= 256 -> block_b = B, grid of 1), f32 output.
    out = exploratory_feature_extractor(x, *params)
    out = jax.block_until_ready(out)
    ref = reference_forward(x, *params)
    assert out.shape == (batch, HIDDEN_UNITS)
    assert out.dtype == jnp.float32
    # bf16 matmul operands with f32 accumulation -> loose tolerance vs f32 ref.
    assert jnp.allclose(out, ref, atol=5e-2, rtol=5e-2)

    # 2) Multi-tile path with a ragged final block (B=20, block_b=16 ->
    #    grid of 2, last block partial; no host pad, no output slice).
    x2 = jax.random.normal(jax.random.PRNGKey(1), (20, state_dim), jnp.float32)
    out2 = jax.block_until_ready(
        exploratory_feature_extractor(x2, *params, block_b=16))
    ref2 = reference_forward(x2, *params)
    assert out2.shape == (20, HIDDEN_UNITS)
    assert jnp.allclose(out2, ref2, atol=5e-2, rtol=5e-2)
    assert bool(jnp.all(jnp.isfinite(out2)))

    # 3) Recommended large-batch configuration: bf16 output + bf16 hidden
    #    bias/relu path (exercised explicitly so both kernel variants compile).
    out3 = jax.block_until_ready(
        exploratory_feature_extractor(x2, *params, block_b=16,
                                      out_dtype=jnp.bfloat16,
                                      hidden_bf16=True))
    assert out3.shape == (20, HIDDEN_UNITS)
    assert out3.dtype == jnp.bfloat16
    assert jnp.allclose(out3.astype(jnp.float32), ref2, atol=1e-1, rtol=1e-1)

    print("KERNEL_OK")
</pallas_src>

<mosaic_0001>
module attributes {stable_mosaic.version = 11 : i64} {
  func.func @_feature_kernel(%arg0: i32, %arg1: memref<8x16xf32, #tpu.memory_space<vmem>>, %arg2: memref<1x16xf32, #tpu.memory_space<vmem>>, %arg3: memref<1x16xf32, #tpu.memory_space<vmem>>, %arg4: memref<16x384xbf16, #tpu.memory_space<vmem>>, %arg5: memref<1x384xf32, #tpu.memory_space<vmem>>, %arg6: memref<384x384xbf16, #tpu.memory_space<vmem>>, %arg7: memref<1x384xf32, #tpu.memory_space<vmem>>, %arg8: memref<8x384xf32, #tpu.memory_space<vmem>>) attributes {dimension_semantics = [#tpu.dimension_semantics<parallel>], iteration_bounds = array<i64: 1>, scalar_prefetch = 0 : i64, scratch_operands = 0 : i64, tpu.core_type = #tpu.core_type<tc>, window_params = [{transform_indices = @transform_0, window_bounds = array<i64: 8, 16>}, {pipeline_mode = #tpu.pipeline_mode<synchronous>, transform_indices = @transform_1, window_bounds = array<i64: 1, 16>}, {pipeline_mode = #tpu.pipeline_mode<synchronous>, transform_indices = @transform_2, window_bounds = array<i64: 1, 16>}, {pipeline_mode = #tpu.pipeline_mode<synchronous>, transform_indices = @transform_3, window_bounds = array<i64: 16, 384>}, {pipeline_mode = #tpu.pipeline_mode<synchronous>, transform_indices = @transform_4, window_bounds = array<i64: 1, 384>}, {pipeline_mode = #tpu.pipeline_mode<synchronous>, transform_indices = @transform_5, window_bounds = array<i64: 384, 384>}, {pipeline_mode = #tpu.pipeline_mode<synchronous>, transform_indices = @transform_6, window_bounds = array<i64: 1, 384>}, {transform_indices = @transform_7, window_bounds = array<i64: 8, 384>}]} {
    %c0 = arith.constant 0 : index
    %c0_0 = arith.constant 0 : index
    %0 = vector.load %arg1[%c0, %c0_0] : memref<8x16xf32, #tpu.memory_space<vmem>>, vector<8x16xf32>
    %c0_1 = arith.constant 0 : index
    %c0_2 = arith.constant 0 : index
    %1 = vector.load %arg2[%c0_1, %c0_2] : memref<1x16xf32, #tpu.memory_space<vmem>>, vector<1x16xf32>
    %2 = vector.broadcast %1 : vector<1x16xf32> to vector<8x16xf32>
    %3 = arith.mulf %0, %2 : vector<8x16xf32>
    %c0_3 = arith.constant 0 : index
    %c0_4 = arith.constant 0 : index
    %4 = vector.load %arg3[%c0_3, %c0_4] : memref<1x16xf32, #tpu.memory_space<vmem>>, vector<1x16xf32>
    %5 = vector.broadcast %4 : vector<1x16xf32> to vector<8x16xf32>
    %6 = arith.addf %3, %5 : vector<8x16xf32>
    %cst = arith.constant -5.000000e+00 : f32
    %cst_5 = arith.constant 5.000000e+00 : f32
    %7 = vector.broadcast %cst : f32 to vector<8x16xf32>
    %8 = arith.maximumf %7, %6 : vector<8x16xf32>
    %9 = vector.broadcast %cst_5 : f32 to vector<8x16xf32>
    %10 = arith.minimumf %9, %8 : vector<8x16xf32>
    %11 = arith.truncf %10 : vector<8x16xf32> to vector<8x16xbf16>
    %c0_6 = arith.constant 0 : index
    %c0_7 = arith.constant 0 : index
    %12 = vector.load %arg4[%c0_6, %c0_7] : memref<16x384xbf16, #tpu.memory_space<vmem>>, vector<16x384xbf16>
    %cst_8 = arith.constant dense<0.000000e+00> : vector<8x384xf32>
    %13 = tpu.matmul %11, %12, %cst_8 {dimension_numbers = #tpu.dot_dimension_numbers<[1], [0], [0], [1], [0, 0, 1, 1], [], []>} : vector<8x16xbf16>, vector<16x384xbf16>, vector<8x384xf32> -> vector<8x384xf32>
    %c0_9 = arith.constant 0 : index
    %c0_10 = arith.constant 0 : index
    %14 = vector.load %arg5[%c0_9, %c0_10] : memref<1x384xf32, #tpu.memory_space<vmem>>, vector<1x384xf32>
    %15 = vector.broadcast %14 : vector<1x384xf32> to vector<8x384xf32>
    %16 = arith.addf %13, %15 : vector<8x384xf32>
    %cst_11 = arith.constant 0.000000e+00 : f32
    %17 = vector.broadcast %cst_11 : f32 to vector<8x384xf32>
    %18 = arith.maximumf %16, %17 : vector<8x384xf32>
    %19 = arith.truncf %18 : vector<8x384xf32> to vector<8x384xbf16>
    %c0_12 = arith.constant 0 : index
    %c0_13 = arith.constant 0 : index
    %20 = vector.load %arg6[%c0_12, %c0_13] : memref<384x384xbf16, #tpu.memory_space<vmem>>, vector<384x384xbf16>
    %cst_14 = arith.constant dense<0.000000e+00> : vector<8x384xf32>
    %21 = tpu.matmul %19, %20, %cst_14 {dimension_numbers = #tpu.dot_dimension_numbers<[1], [0], [0], [1], [0, 0, 1, 1], [], []>} : vector<8x384xbf16>, vector<384x384xbf16>, vector<8x384xf32> -> vector<8x384xf32>
    %c0_15 = arith.constant 0 : index
    %c0_16 = arith.constant 0 : index
    %22 = vector.load %arg7[%c0_15, %c0_16] : memref<1x384xf32, #tpu.memory_space<vmem>>, vector<1x384xf32>
    %23 = vector.broadcast %22 : vector<1x384xf32> to vector<8x384xf32>
    %24 = arith.addf %21, %23 : vector<8x384xf32>
    %cst_17 = arith.constant 0.000000e+00 : f32
    %25 = vector.broadcast %cst_17 : f32 to vector<8x384xf32>
    %26 = arith.maximumf %24, %25 : vector<8x384xf32>
    %c0_18 = arith.constant 0 : index
    %c0_19 = arith.constant 0 : index
    %27 = vector.load %arg8[%c0_18, %c0_19] : memref<8x384xf32, #tpu.memory_space<vmem>>, vector<8x384xf32>
    tpu.vector_store %arg8[%c0_18, %c0_19], %26 {strides = array<i32>} : memref<8x384xf32, #tpu.memory_space<vmem>>, vector<8x384xf32>,
    return
  }
  func.func @transform_0(%arg0: i32) -> (i32, i32) {
    %c0_i32 = arith.constant 0 : i32
    %c0_i32_0 = arith.constant 0 : i32
    return %arg0, %c0_i32 : i32, i32
  }
  func.func @transform_1(%arg0: i32) -> (i32, i32) {
    %c0_i32 = arith.constant 0 : i32
    %c0_i32_0 = arith.constant 0 : i32
    %c0_i32_1 = arith.constant 0 : i32
    return %c0_i32, %c0_i32_0 : i32, i32
  }
  func.func @transform_2(%arg0: i32) -> (i32, i32) {
    %c0_i32 = arith.constant 0 : i32
    %c0_i32_0 = arith.constant 0 : i32
    %c0_i32_1 = arith.constant 0 : i32
    return %c0_i32, %c0_i32_0 : i32, i32
  }
  func.func @transform_3(%arg0: i32) -> (i32, i32) {
    %c0_i32 = arith.constant 0 : i32
    %c0_i32_0 = arith.constant 0 : i32
    %c0_i32_1 = arith.constant 0 : i32
    return %c0_i32, %c0_i32_0 : i32, i32
  }
  func.func @transform_4(%arg0: i32) -> (i32, i32) {
    %c0_i32 = arith.constant 0 : i32
    %c0_i32_0 = arith.constant 0 : i32
    %c0_i32_1 = arith.constant 0 : i32
    return %c0_i32, %c0_i32_0 : i32, i32
  }
  func.func @transform_5(%arg0: i32) -> (i32, i32) {
    %c0_i32 = arith.constant 0 : i32
    %c0_i32_0 = arith.constant 0 : i32
    %c0_i32_1 = arith.constant 0 : i32
    return %c0_i32, %c0_i32_0 : i32, i32
  }
  func.func @transform_6(%arg0: i32) -> (i32, i32) {
    %c0_i32 = arith.constant 0 : i32
    %c0_i32_0 = arith.constant 0 : i32
    %c0_i32_1 = arith.constant 0 : i32
    return %c0_i32, %c0_i32_0 : i32, i32
  }
  func.func @transform_7(%arg0: i32) -> (i32, i32) {
    %c0_i32 = arith.constant 0 : i32
    %c0_i32_0 = arith.constant 0 : i32
    return %arg0, %c0_i32 : i32, i32
  }
}

</mosaic_0001>

<llo_original>
// kernel: _forward.1
$region0: #{_forward.1}
  #allocation0 [shape = 'u32[]', space=smem, size = 0x4, offset = 0x4, fixed_abs, tag = 'smem constant byte address 0x4 - core index']
  #allocation1 [shape = 'u32[144,128]{1,0:T(1,128)}', space=vmem, size = 0x12000, scoped, tag = 'internal scratch']
  %s0 = inlined_call_operand.vmem [shape: f32[8,16], index: 0, kind: input, shape index: {}]
  %s1 = inlined_call_operand.vmem [shape: f32[1,16], index: 1, kind: input, shape index: {}]
  %s2 = inlined_call_operand.vmem [shape: f32[1,16], index: 2, kind: input, shape index: {}]
  %s3 = inlined_call_operand.vmem [shape: bf16[16,384], index: 3, kind: input, shape index: {}]
  %s4 = inlined_call_operand.vmem [shape: f32[1,384], index: 4, kind: input, shape index: {}]
  %s5 = inlined_call_operand.vmem [shape: bf16[384,384], index: 5, kind: input, shape index: {}]
  %s6 = inlined_call_operand.vmem [shape: f32[1,384], index: 6, kind: input, shape index: {}]
  %s7 = inlined_call_operand.hbm [shape: f32[8,384], index: 7, kind: output, shape index: {}]
  %s8 = sld [smem:[#allocation0]]
  $region38: #{_forward.1} parent=0
    _
  %s10 = ssub.s32 1, %s8
  %s11 = scalar_select 0, %s10, %s8
  $region1: #{_forward.1} parent=0
    #allocation2 [shape = 'u8[12288]{0}', space=vmem, size = 0x3000, scoped, tag = 'output window, operand 0, single buffered']
    #allocation3 [shape = 's32[1]{0}', space=sflag, size = 0x4, scoped, tag = 'scoped memory for _forward.1']
    %12 = vsyncpa [#allocation3], 0
    // Predicated region
    $region2: #{_forward.1} parent=1 // pred_check
      _
    $region3: #{_forward.1} parent=1 // pred_check_branch
      %14 = sbr.rel (0) target = $region5
    $region4: #{_forward.1} parent=1 // pred_region
      _
    $region5: #{_forward.1} parent=1 // pred_fallthru
      _
    // Predicated region
    $region6: #{_forward.1} parent=1 // pred_check
      _
    $region7: #{_forward.1} parent=1 // pred_check_branch
      %16 = sbr.rel (0) target = $region9
    $region8: #{_forward.1} parent=1 // pred_region
      _
    $region9: #{_forward.1} parent=1 // pred_fallthru
      _
    // Predicated region
    $region10: #{_forward.1} parent=1 // pred_check
      _
    $region11: #{_forward.1} parent=1 // pred_check_branch
      %18 = sbr.rel (0) target = $region13
    $region12: #{_forward.1} parent=1 // pred_region
      _
    $region13: #{_forward.1} parent=1 // pred_fallthru
      _
    // Predicated region
    $region14: #{_forward.1} parent=1 // pred_check
      _
    $region15: #{_forward.1} parent=1 // pred_check_branch
      %20 = sbr.rel (0) target = $region17
    $region16: #{_forward.1} parent=1 // pred_region
      _
    $region17: #{_forward.1} parent=1 // pred_fallthru
      _
    // Predicated region
    $region18: #{_forward.1} parent=1 // pred_check
      _
    $region19: #{_forward.1} parent=1 // pred_check_branch
      %22 = sbr.rel (0) target = $region21
    $region20: #{_forward.1} parent=1 // pred_region
      _
    $region21: #{_forward.1} parent=1 // pred_fallthru
      _
    // Predicated region
    $region22: #{_forward.1} parent=1 // pred_check
      _
    $region23: #{_forward.1} parent=1 // pred_check_branch
      %24 = sbr.rel (0) target = $region25
    $region24: #{_forward.1} parent=1 // pred_region
      _
    $region25: #{_forward.1} parent=1 // pred_fallthru
      _
    // Predicated region
    $region26: #{_forward.1} parent=1 // pred_check
      _
    $region27: #{_forward.1} parent=1 // pred_check_branch
      %26 = sbr.rel (0) target = $region29
    $region28: #{_forward.1} parent=1 // pred_region
      _
    $region29: #{_forward.1} parent=1 // pred_fallthru
      _
    %v28 = vld [vmem:[%s0] sm:$0xff]
    %v29 = vld [vmem:[%s1] sm:$0x1]
    %v31 = vlaneseq
    %v32 = vshrl.u32 %v31, 7
    %v33 = vsub.s32 0, %v32
    %v34 = vrot.slane %v29, %v33
    %v36 = vmul.f32 %v28, %v34
    %v37 = vld [vmem:[%s2] sm:$0x1]
    %v39 = vlaneseq
    %v40 = vshrl.u32 %v39, 7
    %v41 = vsub.s32 0, %v40
    %v42 = vrot.slane %v37, %v41
    %v44 = vadd.f32 %v36, %v42
    %v45 = vmax.f32 %v44, -5.0
    %v46 = vmin.f32 %v45, 5.0
    %v47 = vpack.c.bf16 %v46, %v46
    %v48 = vld [vmem:[%s3] sm:$0xff]
    %v49 = vld [vmem:[%s3 + $0x8] sm:$0xf]
    %v50 = vld [vmem:[%s3 + $0xc] sm:$0xff]
    %v51 = vld [vmem:[%s3 + $0x14] sm:$0xf]
    %v52 = vld [vmem:[%s4] sm:$0x7]
    %v54 = vlaneseq
    %v55 = vshrl.u32 %v54, 7
    %v56 = vsub.s32 0, %v55
    %v57 = vrot.slane %v52, %v56
    %v58 = vlaneseq
    %v59 = vshrl.u32 %v58, 7
    %v60 = vsub.s32 1, %v59
    %v61 = vrot.slane %v52, %v60
    %v62 = vlaneseq
    %v63 = vshrl.u32 %v62, 7
    %v64 = vsub.s32 2, %v63
    %v65 = vrot.slane %v52, %v64
    %v73 = vunpack.c.l.b16 %v48
    %v74 = vunpack.c.h.b16 %v48
    %v75 = vunpack.c.l.b16 %v49
    %v76 = vunpack.c.l.b16 %v50
    %v77 = vunpack.c.h.b16 %v50
    %v78 = vunpack.c.l.b16 %v51
    %v79 = vpack.c.b16 %v76, %v73
    %v80 = vpack.c.b16 %v77, %v74
    %v81 = vpack.c.b16 %v78, %v75
    %vm85 = vcmask 130048
    %v87 = vsel %vm85, %v47, 0
    %89 = vmatprep.subr.bf16.mxu0 %v80
    %90 = vmatpush1.bf16.msra.mxu0 %v79
    %91 = vmatprep.subr.bf16.mxu0 0
    %92 = vmatpush1.bf16.msra.mxu0 0
    %93 = vmatprep.subr.bf16.mxu0 0
    %94 = vmatpush1.bf16.msra.mxu0 0
    %95 = vmatprep.subr.bf16.mxu0 0
    %96 = vmatpush1.bf16.msra.mxu0 0
    %97 = vmatprep.subr.bf16.mxu0 0
    %98 = vmatpush1.bf16.msra.mxu0 0
    %99 = vmatprep.subr.bf16.mxu0 0
    %100 = vmatpush1.bf16.msra.mxu0 0
    %101 = vmatprep.subr.bf16.mxu0 0
    %102 = vmatpush1.bf16.msra.mxu0 0
    %103 = vmatprep.subr.bf16.mxu0 0
    %104 = vmatpush1.bf16.msra.mxu0 0
    %105 = vmatprep.subr.bf16.mxu0 0
    %106 = vmatpush1.bf16.msra.mxu0 0
    %107 = vmatprep.subr.bf16.mxu0 0
    %108 = vmatpush1.bf16.msra.mxu0 0
    %109 = vmatprep.subr.bf16.mxu0 0
    %110 = vmatpush1.bf16.msra.mxu0 0
    %111 = vmatprep.subr.bf16.mxu0 0
    %112 = vmatpush1.bf16.msra.mxu0 0
    %113 = vmatprep.subr.bf16.mxu0 0
    %114 = vmatpush1.bf16.msra.mxu0 0
    %115 = vmatprep.subr.bf16.mxu0 0
    %116 = vmatpush1.bf16.msra.mxu0 0
    %117 = vmatprep.subr.bf16.mxu0 0
    %118 = vmatpush1.bf16.msra.mxu0 0
    %119 = vmatprep.subr.bf16.mxu0 0
    %120 = vmatpush1.bf16.msra.mxu0 0
    %121 = vmatprep.mubr.bf16.mxu0 0
    %122 = vmatmul.mubr.bf16.gmra.mrb[0].mxu0 %v87
    %v123 = vpop.f32.mrb[0].mxu0
    %v124 = vadd.f32 %v57, %v123
    %v125 = vpop.f32.mrb[0].mxu0
    %v126 = vadd.f32 %v61, %v125
    %v127 = vpop.f32.mrb[0].mxu0
    %v128 = vpop.f32.mrb[0].mxu0
    %129 = vdwg.mxu0
    %130 = vmatprep.subr.bf16.mxu0 0
    %131 = vmatpush1.bf16.msra.mxu0 %v81
    %132 = vmatprep.subr.bf16.mxu0 0
    %133 = vmatpush1.bf16.msra.mxu0 0
    %134 = vmatprep.subr.bf16.mxu0 0
    %135 = vmatpush1.bf16.msra.mxu0 0
    %136 = vmatprep.subr.bf16.mxu0 0
    %137 = vmatpush1.bf16.msra.mxu0 0
    %138 = vmatprep.subr.bf16.mxu0 0
    %139 = vmatpush1.bf16.msra.mxu0 0
    %140 = vmatprep.subr.bf16.mxu0 0
    %141 = vmatpush1.bf16.msra.mxu0 0
    %142 = vmatprep.subr.bf16.mxu0 0
    %143 = vmatpush1.bf16.msra.mxu0 0
    %144 = vmatprep.subr.bf16.mxu0 0
    %145 = vmatpush1.bf16.msra.mxu0 0
    %146 = vmatprep.subr.bf16.mxu0 0
    %147 = vmatpush1.bf16.msra.mxu0 0
    %148 = vmatprep.subr.bf16.mxu0 0
    %149 = vmatpush1.bf16.msra.mxu0 0
    %150 = vmatprep.subr.bf16.mxu0 0
    %151 = vmatpush1.bf16.msra.mxu0 0
    %152 = vmatprep.subr.bf16.mxu0 0
    %153 = vmatpush1.bf16.msra.mxu0 0
    %154 = vmatprep.subr.bf16.mxu0 0
    %155 = vmatpush1.bf16.msra.mxu0 0
    %156 = vmatprep.subr.bf16.mxu0 0
    %157 = vmatpush1.bf16.msra.mxu0 0
    %158 = vmatprep.subr.bf16.mxu0 0
    %159 = vmatpush1.bf16.msra.mxu0 0
    %160 = vmatprep.subr.bf16.mxu0 0
    %161 = vmatpush1.bf16.msra.mxu0 0
    %162 = vmatprep.mubr.bf16.mxu0 0
    %163 = vmatmul.mubr.bf16.gmra.mrb[0].mxu0 %v87
    %v164 = vpop.f32.mrb[0].mxu0
    %v165 = vadd.f32 %v65, %v164
    %v166 = vpop.f32.mrb[0].mxu0
    %v167 = vpop.f32.mrb[0].mxu0
    %v168 = vpop.f32.mrb[0].mxu0
    %169 = vdwg.mxu0
    %v170 = vmax.f32 %v124, 0.0
    %v171 = vmax.f32 %v126, 0.0
    %v172 = vmax.f32 %v165, 0.0
    %v173 = vpack.c.bf16 %v170, %v170
    %v174 = vpack.c.bf16 %v171, %v171
    %v175 = vpack.c.bf16 %v172, %v172
    %v176 = vld [vmem:[%s5] sm:$0xff]
    %v177 = vld [vmem:[%s5 + $0x8] sm:$0xf]
    %v178 = vld [vmem:[%s5 + $0xc] sm:$0xff]
    %v179 = vld [vmem:[%s5 + $0x14] sm:$0xf]
    %v180 = vld [vmem:[%s5 + $0x18] sm:$0xff]
    %v181 = vld [vmem:[%s5 + $0x20] sm:$0xf]
    %v182 = vld [vmem:[%s5 + $0x24] sm:$0xff]
    %v183 = vld [vmem:[%s5 + $0x2c] sm:$0xf]
    %v184 = vld [vmem:[%s5 + $0x30] sm:$0xff]
    %v185 = vld [vmem:[%s5 + $0x38] sm:$0xf]
    %v186 = vld [vmem:[%s5 + $0x3c] sm:$0xff]
    %v187 = vld [vmem:[%s5 + $0x44] sm:$0xf]
    %v188 = vld [vmem:[%s5 + $0x48] sm:$0xff]
    %v189 = vld [vmem:[%s5 + $0x50] sm:$0xf]
    %v190 = vld [vmem:[%s5 + $0x54] sm:$0xff]
    %v191 = vld [vmem:[%s5 + $0x5c] sm:$0xf]
    %v192 = vld [vmem:[%s5 + $0x60] sm:$0xff]
    %v193 = vld [vmem:[%s5 + $0x68] sm:$0xf]
    %v194 = vld [vmem:[%s5 + $0x6c] sm:$0xff]
    %v195 = vld [vmem:[%s5 + $0x74] sm:$0xf]
    %v196 = vld [vmem:[%s5 + $0x78] sm:$0xff]
    %v197 = vld [vmem:[%s5 + $0x80] sm:$0xf]
    %v198 = vld [vmem:[%s5 + $0x84] sm:$0xff]
    %v199 = vld [vmem:[%s5 + $0x8c] sm:$0xf]
    %v200 = vld [vmem:[%s5 + $0x90] sm:$0xff]
    %v201 = vld [vmem:[%s5 + $0x98] sm:$0xf]
    %v202 = vld [vmem:[%s5 + $0x9c] sm:$0xff]
    %v203 = vld [vmem:[%s5 + $0xa4] sm:$0xf]
    %v204 = vld [vmem:[%s5 + $0xa8] sm:$0xff]
    %v205 = vld [vmem:[%s5 + $0xb0] sm:$0xf]
    %v206 = vld [vmem:[%s5 + $0xb4] sm:$0xff]
    %v207 = vld [vmem:[%s5 + $0xbc] sm:$0xf]
    %v208 = vld [vmem:[%s5 + $0xc0] sm:$0xff]
    %v209 = vld [vmem:[%s5 + $0xc8] sm:$0xf]
    %v210 = vld [vmem:[%s5 + $0xcc] sm:$0xff]
    %v211 = vld [vmem:[%s5 + $0xd4] sm:$0xf]
    %v212 = vld [vmem:[%s5 + $0xd8] sm:$0xff]
    %v213 = vld [vmem:[%s5 + $0xe0] sm:$0xf]
    %v214 = vld [vmem:[%s5 + $0xe4] sm:$0xff]
    %v215 = vld [vmem:[%s5 + $0xec] sm:$0xf]
    %v216 = vld [vmem:[%s5 + $0xf0] sm:$0xff]
    %v217 = vld [vmem:[%s5 + $0xf8] sm:$0xf]
    %v218 = vld [vmem:[%s5 + $0xfc] sm:$0xff]
    %v219 = vld [vmem:[%s5 + $0x104] sm:$0xf]
    %v220 = vld [vmem:[%s5 + $0x108] sm:$0xff]
    %v221 = vld [vmem:[%s5 + $0x110] sm:$0xf]
    %v222 = vld [vmem:[%s5 + $0x114] sm:$0xff]
    %v223 = vld [vmem:[%s5 + $0x11c] sm:$0xf]
    %v224 = vld [vmem:[%s5 + $0x120] sm:$0xff]
    %v225 = vld [vmem:[%s5 + $0x128] sm:$0xf]
    %v226 = vld [vmem:[%s5 + $0x12c] sm:$0xff]
    %v227 = vld [vmem:[%s5 + $0x134] sm:$0xf]
    %v228 = vld [vmem:[%s5 + $0x138] sm:$0xff]
    %v229 = vld [vmem:[%s5 + $0x140] sm:$0xf]
    %v230 = vld [vmem:[%s5 + $0x144] sm:$0xff]
    %v231 = vld [vmem:[%s5 + $0x14c] sm:$0xf]
    %v232 = vld [vmem:[%s5 + $0x150] sm:$0xff]
    %v233 = vld [vmem:[%s5 + $0x158] sm:$0xf]
    %v234 = vld [vmem:[%s5 + $0x15c] sm:$0xff]
    %v235 = vld [vmem:[%s5 + $0x164] sm:$0xf]
    %v236 = vld [vmem:[%s5 + $0x168] sm:$0xff]
    %v237 = vld [vmem:[%s5 + $0x170] sm:$0xf]
    %v238 = vld [vmem:[%s5 + $0x174] sm:$0xff]
    %v239 = vld [vmem:[%s5 + $0x17c] sm:$0xf]
    %v240 = vld [vmem:[%s5 + $0x180] sm:$0xff]
    %v241 = vld [vmem:[%s5 + $0x188] sm:$0xf]
    %v242 = vld [vmem:[%s5 + $0x18c] sm:$0xff]
    %v243 = vld [vmem:[%s5 + $0x194] sm:$0xf]
    %v244 = vld [vmem:[%s5 + $0x198] sm:$0xff]
    %v245 = vld [vmem:[%s5 + $0x1a0] sm:$0xf]
    %v246 = vld [vmem:[%s5 + $0x1a4] sm:$0xff]
    %v247 = vld [vmem:[%s5 + $0x1ac] sm:$0xf]
    %v248 = vld [vmem:[%s5 + $0x1b0] sm:$0xff]
    %v249 = vld [vmem:[%s5 + $0x1b8] sm:$0xf]
    %v250 = vld [vmem:[%s5 + $0x1bc] sm:$0xff]
    %v251 = vld [vmem:[%s5 + $0x1c4] sm:$0xf]
    %v252 = vld [vmem:[%s5 + $0x1c8] sm:$0xff]
    %v253 = vld [vmem:[%s5 + $0x1d0] sm:$0xf]
    %v254 = vld [vmem:[%s5 + $0x1d4] sm:$0xff]
    %v255 = vld [vmem:[%s5 + $0x1dc] sm:$0xf]
    %v256 = vld [vmem:[%s5 + $0x1e0] sm:$0xff]
    %v257 = vld [vmem:[%s5 + $0x1e8] sm:$0xf]
    %v258 = vld [vmem:[%s5 + $0x1ec] sm:$0xff]
    %v259 = vld [vmem:[%s5 + $0x1f4] sm:$0xf]
    %v260 = vld [vmem:[%s5 + $0x1f8] sm:$0xff]
    %v261 = vld [vmem:[%s5 + $0x200] sm:$0xf]
    %v262 = vld [vmem:[%s5 + $0x204] sm:$0xff]
    %v263 = vld [vmem:[%s5 + $0x20c] sm:$0xf]
    %v264 = vld [vmem:[%s5 + $0x210] sm:$0xff]
    %v265 = vld [vmem:[%s5 + $0x218] sm:$0xf]
    %v266 = vld [vmem:[%s5 + $0x21c] sm:$0xff]
    %v267 = vld [vmem:[%s5 + $0x224] sm:$0xf]
    %v268 = vld [vmem:[%s5 + $0x228] sm:$0xff]
    %v269 = vld [vmem:[%s5 + $0x230] sm:$0xf]
    %v270 = vld [vmem:[%s5 + $0x234] sm:$0xff]
    %v271 = vld [vmem:[%s5 + $0x23c] sm:$0xf]
    %v272 = vld [vmem:[%s6] sm:$0x7]
    %v274 = vlaneseq
    %v275 = vshrl.u32 %v274, 7
    %v276 = vsub.s32 0, %v275
    %v277 = vrot.slane %v272, %v276
    %v278 = vlaneseq
    %v279 = vshrl.u32 %v278, 7
    %v280 = vsub.s32 1, %v279
    %v281 = vrot.slane %v272, %v280
    %v282 = vlaneseq
    %v283 = vshrl.u32 %v282, 7
    %v284 = vsub.s32 2, %v283
    %v285 = vrot.slane %v272, %v284
    %v385 = vunpack.c.l.b16 %v176
    %v386 = vunpack.c.h.b16 %v176
    %v387 = vunpack.c.l.b16 %v177
    %v388 = vunpack.c.l.b16 %v178
    %v389 = vunpack.c.h.b16 %v178
    %v390 = vunpack.c.l.b16 %v179
    %v391 = vunpack.c.l.b16 %v180
    %v392 = vunpack.c.h.b16 %v180
    %v393 = vunpack.c.l.b16 %v181
    %v394 = vunpack.c.l.b16 %v182
    %v395 = vunpack.c.h.b16 %v182
    %v396 = vunpack.c.l.b16 %v183
    %v397 = vunpack.c.l.b16 %v184
    %v398 = vunpack.c.h.b16 %v184
    %v399 = vunpack.c.l.b16 %v185
    %v400 = vunpack.c.l.b16 %v186
    %v401 = vunpack.c.h.b16 %v186
    %v402 = vunpack.c.l.b16 %v187
    %v403 = vunpack.c.l.b16 %v188
    %v404 = vunpack.c.h.b16 %v188
    %v405 = vunpack.c.l.b16 %v189
    %v406 = vunpack.c.l.b16 %v190
    %v407 = vunpack.c.h.b16 %v190
    %v408 = vunpack.c.l.b16 %v191
    %v409 = vunpack.c.l.b16 %v192
    %v410 = vunpack.c.h.b16 %v192
    %v411 = vunpack.c.l.b16 %v193
    %v412 = vunpack.c.l.b16 %v194
    %v413 = vunpack.c.h.b16 %v194
    %v414 = vunpack.c.l.b16 %v195
    %v415 = vunpack.c.l.b16 %v196
    %v416 = vunpack.c.h.b16 %v196
    %v417 = vunpack.c.l.b16 %v197
    %v418 = vunpack.c.l.b16 %v198
    %v419 = vunpack.c.h.b16 %v198
    %v420 = vunpack.c.l.b16 %v199
    %v421 = vunpack.c.l.b16 %v200
    %v422 = vunpack.c.h.b16 %v200
    %v423 = vunpack.c.l.b16 %v201
    %v424 = vunpack.c.l.b16 %v202
    %v425 = vunpack.c.h.b16 %v202
    %v426 = vunpack.c.l.b16 %v203
    %v427 = vunpack.c.l.b16 %v204
    %v428 = vunpack.c.h.b16 %v204
    %v429 = vunpack.c.l.b16 %v205
    %v430 = vunpack.c.l.b16 %v206
    %v431 = vunpack.c.h.b16 %v206
    %v432 = vunpack.c.l.b16 %v207
    %v433 = vunpack.c.l.b16 %v208
    %v434 = vunpack.c.h.b16 %v208
    %v435 = vunpack.c.l.b16 %v209
    %v436 = vunpack.c.l.b16 %v210
    %v437 = vunpack.c.h.b16 %v210
    %v438 = vunpack.c.l.b16 %v211
    %v439 = vunpack.c.l.b16 %v212
    %v440 = vunpack.c.h.b16 %v212
    %v441 = vunpack.c.l.b16 %v213
    %v442 = vunpack.c.l.b16 %v214
    %v443 = vunpack.c.h.b16 %v214
    %v444 = vunpack.c.l.b16 %v215
    %v445 = vunpack.c.l.b16 %v216
    %v446 = vunpack.c.h.b16 %v216
    %v447 = vunpack.c.l.b16 %v217
    %v448 = vunpack.c.l.b16 %v218
    %v449 = vunpack.c.h.b16 %v218
    %v450 = vunpack.c.l.b16 %v219
    %v451 = vunpack.c.l.b16 %v220
    %v452 = vunpack.c.h.b16 %v220
    %v453 = vunpack.c.l.b16 %v221
    %v454 = vunpack.c.l.b16 %v222
    %v455 = vunpack.c.h.b16 %v222
    %v456 = vunpack.c.l.b16 %v223
    %v457 = vunpack.c.l.b16 %v224
    %v458 = vunpack.c.h.b16 %v224
    %v459 = vunpack.c.l.b16 %v225
    %v460 = vunpack.c.l.b16 %v226
    %v461 = vunpack.c.h.b16 %v226
    %v462 = vunpack.c.l.b16 %v227
    %v463 = vunpack.c.l.b16 %v228
    %v464 = vunpack.c.h.b16 %v228
    %v465 = vunpack.c.l.b16 %v229
    %v466 = vunpack.c.l.b16 %v230
    %v467 = vunpack.c.h.b16 %v230
    %v468 = vunpack.c.l.b16 %v231
    %v469 = vunpack.c.l.b16 %v232
    %v470 = vunpack.c.h.b16 %v232
    %v471 = vunpack.c.l.b16 %v233
    %v472 = vunpack.c.l.b16 %v234
    %v473 = vunpack.c.h.b16 %v234
    %v474 = vunpack.c.l.b16 %v235
    %v475 = vunpack.c.l.b16 %v236
    %v476 = vunpack.c.h.b16 %v236
    %v477 = vunpack.c.l.b16 %v237
    %v478 = vunpack.c.l.b16 %v238
    %v479 = vunpack.c.h.b16 %v238
    %v480 = vunpack.c.l.b16 %v239
    %v481 = vunpack.c.l.b16 %v240
    %v482 = vunpack.c.h.b16 %v240
    %v483 = vunpack.c.l.b16 %v241
    %v484 = vunpack.c.l.b16 %v242
    %v485 = vunpack.c.h.b16 %v242
    %v486 = vunpack.c.l.b16 %v243
    %v487 = vunpack.c.l.b16 %v244
    %v488 = vunpack.c.h.b16 %v244
    %v489 = vunpack.c.l.b16 %v245
    %v490 = vunpack.c.l.b16 %v246
    %v491 = vunpack.c.h.b16 %v246
    %v492 = vunpack.c.l.b16 %v247
    %v493 = vunpack.c.l.b16 %v248
    %v494 = vunpack.c.h.b16 %v248
    %v495 = vunpack.c.l.b16 %v249
    %v496 = vunpack.c.l.b16 %v250
    %v497 = vunpack.c.h.b16 %v250
    %v498 = vunpack.c.l.b16 %v251
    %v499 = vunpack.c.l.b16 %v252
    %v500 = vunpack.c.h.b16 %v252
    %v501 = vunpack.c.l.b16 %v253
    %v502 = vunpack.c.l.b16 %v254
    %v503 = vunpack.c.h.b16 %v254
    %v504 = vunpack.c.l.b16 %v255
    %v505 = vunpack.c.l.b16 %v256
    %v506 = vunpack.c.h.b16 %v256
    %v507 = vunpack.c.l.b16 %v257
    %v508 = vunpack.c.l.b16 %v258
    %v509 = vunpack.c.h.b16 %v258
    %v510 = vunpack.c.l.b16 %v259
    %v511 = vunpack.c.l.b16 %v260
    %v512 = vunpack.c.h.b16 %v260
    %v513 = vunpack.c.l.b16 %v261
    %v514 = vunpack.c.l.b16 %v262
    %v515 = vunpack.c.h.b16 %v262
    %v516 = vunpack.c.l.b16 %v263
    %v517 = vunpack.c.l.b16 %v264
    %v518 = vunpack.c.h.b16 %v264
    %v519 = vunpack.c.l.b16 %v265
    %v520 = vunpack.c.l.b16 %v266
    %v521 = vunpack.c.h.b16 %v266
    %v522 = vunpack.c.l.b16 %v267
    %v523 = vunpack.c.l.b16 %v268
    %v524 = vunpack.c.h.b16 %v268
    %v525 = vunpack.c.l.b16 %v269
    %v526 = vunpack.c.l.b16 %v270
    %v527 = vunpack.c.h.b16 %v270
    %v528 = vunpack.c.l.b16 %v271
    %v529 = vpack.c.b16 %v388, %v385
    %v530 = vpack.c.b16 %v389, %v386
    %v531 = vpack.c.b16 %v390, %v387
    %v532 = vpack.c.b16 %v394, %v391
    %v533 = vpack.c.b16 %v395, %v392
    %v534 = vpack.c.b16 %v396, %v393
    %v535 = vpack.c.b16 %v400, %v397
    %v536 = vpack.c.b16 %v401, %v398
    %v537 = vpack.c.b16 %v402, %v399
    %v538 = vpack.c.b16 %v406, %v403
    %v539 = vpack.c.b16 %v407, %v404
    %v540 = vpack.c.b16 %v408, %v405
    %v541 = vpack.c.b16 %v412, %v409
    %v542 = vpack.c.b16 %v413, %v410
    %v543 = vpack.c.b16 %v414, %v411
    %v544 = vpack.c.b16 %v418, %v415
    %v545 = vpack.c.b16 %v419, %v416
    %v546 = vpack.c.b16 %v420, %v417
    %v547 = vpack.c.b16 %v424, %v421
    %v548 = vpack.c.b16 %v425, %v422
    %v549 = vpack.c.b16 %v426, %v423
    %v550 = vpack.c.b16 %v430, %v427
    %v551 = vpack.c.b16 %v431, %v428
    %v552 = vpack.c.b16 %v432, %v429
    %v553 = vpack.c.b16 %v436, %v433
    %v554 = vpack.c.b16 %v437, %v434
    %v555 = vpack.c.b16 %v438, %v435
    %v556 = vpack.c.b16 %v442, %v439
    %v557 = vpack.c.b16 %v443, %v440
    %v558 = vpack.c.b16 %v444, %v441
    %v559 = vpack.c.b16 %v448, %v445
    %v560 = vpack.c.b16 %v449, %v446
    %v561 = vpack.c.b16 %v450, %v447
    %v562 = vpack.c.b16 %v454, %v451
    %v563 = vpack.c.b16 %v455, %v452
    %v564 = vpack.c.b16 %v456, %v453
    %v565 = vpack.c.b16 %v460, %v457
    %v566 = vpack.c.b16 %v461, %v458
    %v567 = vpack.c.b16 %v462, %v459
    %v568 = vpack.c.b16 %v466, %v463
    %v569 = vpack.c.b16 %v467, %v464
    %v570 = vpack.c.b16 %v468, %v465
    %v571 = vpack.c.b16 %v472, %v469
    %v572 = vpack.c.b16 %v473, %v470
    %v573 = vpack.c.b16 %v474, %v471
    %v574 = vpack.c.b16 %v478, %v475
    %v575 = vpack.c.b16 %v479, %v476
    %v576 = vpack.c.b16 %v480, %v477
    %v577 = vpack.c.b16 %v484, %v481
    %v578 = vpack.c.b16 %v485, %v482
    %v579 = vpack.c.b16 %v486, %v483
    %v580 = vpack.c.b16 %v490, %v487
    %v581 = vpack.c.b16 %v491, %v488
    %v582 = vpack.c.b16 %v492, %v489
    %v583 = vpack.c.b16 %v496, %v493
    %v584 = vpack.c.b16 %v497, %v494
    %v585 = vpack.c.b16 %v498, %v495
    %v586 = vpack.c.b16 %v502, %v499
    %v587 = vpack.c.b16 %v503, %v500
    %v588 = vpack.c.b16 %v504, %v501
    %v589 = vpack.c.b16 %v508, %v505
    %v590 = vpack.c.b16 %v509, %v506
    %v591 = vpack.c.b16 %v510, %v507
    %v592 = vpack.c.b16 %v514, %v511
    %v593 = vpack.c.b16 %v515, %v512
    %v594 = vpack.c.b16 %v516, %v513
    %v595 = vpack.c.b16 %v520, %v517
    %v596 = vpack.c.b16 %v521, %v518
    %v597 = vpack.c.b16 %v522, %v519
    %v598 = vpack.c.b16 %v526, %v523
    %v599 = vpack.c.b16 %v527, %v524
    %v600 = vpack.c.b16 %v528, %v525
    %673 = vmatprep.subr.bf16.mxu0 %v530
    %674 = vmatpush1.bf16.msra.mxu0 %v529
    %675 = vmatprep.subr.bf16.mxu0 %v533
    %676 = vmatpush1.bf16.msra.mxu0 %v532
    %677 = vmatprep.subr.bf16.mxu0 %v536
    %678 = vmatpush1.bf16.msra.mxu0 %v535
    %679 = vmatprep.subr.bf16.mxu0 %v539
    %680 = vmatpush1.bf16.msra.mxu0 %v538
    %681 = vmatprep.subr.bf16.mxu0 %v542
    %682 = vmatpush1.bf16.msra.mxu0 %v541
    %683 = vmatprep.subr.bf16.mxu0 %v545
    %684 = vmatpush1.bf16.msra.mxu0 %v544
    %685 = vmatprep.subr.bf16.mxu0 %v548
    %686 = vmatpush1.bf16.msra.mxu0 %v547
    %687 = vmatprep.subr.bf16.mxu0 %v551
    %688 = vmatpush1.bf16.msra.mxu0 %v550
    %689 = vmatprep.subr.bf16.mxu0 %v554
    %690 = vmatpush1.bf16.msra.mxu0 %v553
    %691 = vmatprep.subr.bf16.mxu0 %v557
    %692 = vmatpush1.bf16.msra.mxu0 %v556
    %693 = vmatprep.subr.bf16.mxu0 %v560
    %694 = vmatpush1.bf16.msra.mxu0 %v559
    %695 = vmatprep.subr.bf16.mxu0 %v563
    %696 = vmatpush1.bf16.msra.mxu0 %v562
    %697 = vmatprep.subr.bf16.mxu0 %v566
    %698 = vmatpush1.bf16.msra.mxu0 %v565
    %699 = vmatprep.subr.bf16.mxu0 %v569
    %700 = vmatpush1.bf16.msra.mxu0 %v568
    %701 = vmatprep.subr.bf16.mxu0 %v572
    %702 = vmatpush1.bf16.msra.mxu0 %v571
    %703 = vmatprep.subr.bf16.mxu0 %v575
    %704 = vmatpush1.bf16.msra.mxu0 %v574
    %705 = vmatprep.mubr.bf16.mxu0 %v174
    %706 = vmatmul.mubr.bf16.gmra.mrb[0].mxu0 %v173
    %v707 = vpop.f32.mrb[0].mxu0
    %v708 = vadd.f32 %v277, %v707
    %v709 = vpop.f32.mrb[0].mxu0
    %v710 = vadd.f32 %v281, %v709
    %v711 = vpop.f32.mrb[0].mxu0
    %v712 = vpop.f32.mrb[0].mxu0
    %713 = vdwg.mxu0
    %714 = vmatprep.subr.bf16.mxu0 %v578
    %715 = vmatpush1.bf16.msra.mxu0 %v577
    %716 = vmatprep.subr.bf16.mxu0 %v581
    %717 = vmatpush1.bf16.msra.mxu0 %v580
    %718 = vmatprep.subr.bf16.mxu0 %v584
    %719 = vmatpush1.bf16.msra.mxu0 %v583
    %720 = vmatprep.subr.bf16.mxu0 %v587
    %721 = vmatpush1.bf16.msra.mxu0 %v586
    %722 = vmatprep.subr.bf16.mxu0 %v590
    %723 = vmatpush1.bf16.msra.mxu0 %v589
    %724 = vmatprep.subr.bf16.mxu0 %v593
    %725 = vmatpush1.bf16.msra.mxu0 %v592
    %726 = vmatprep.subr.bf16.mxu0 %v596
    %727 = vmatpush1.bf16.msra.mxu0 %v595
    %728 = vmatprep.subr.bf16.mxu0 %v599
    %729 = vmatpush1.bf16.msra.mxu0 %v598
    %730 = vmatprep.subr.bf16.mxu0 0
    %731 = vmatpush1.bf16.msra.mxu0 0
    %732 = vmatprep.subr.bf16.mxu0 0
    %733 = vmatpush1.bf16.msra.mxu0 0
    %734 = vmatprep.subr.bf16.mxu0 0
    %735 = vmatpush1.bf16.msra.mxu0 0
    %736 = vmatprep.subr.bf16.mxu0 0
    %737 = vmatpush1.bf16.msra.mxu0 0
    %738 = vmatprep.subr.bf16.mxu0 0
    %739 = vmatpush1.bf16.msra.mxu0 0
    %740 = vmatprep.subr.bf16.mxu0 0
    %741 = vmatpush1.bf16.msra.mxu0 0
    %742 = vmatprep.subr.bf16.mxu0 0
    %743 = vmatpush1.bf16.msra.mxu0 0
    %744 = vmatprep.subr.bf16.mxu0 0
    %745 = vmatpush1.bf16.msra.mxu0 0
    %746 = vmatprep.mubr.bf16.mxu0 0
    %747 = vmatmul.mubr.bf16.gmra.mrb[0].mxu0 %v175
    %v748 = vpop.f32.mrb[0].mxu0
    %v749 = vadd.f32 %v708, %v748
    %v750 = vpop.f32.mrb[0].mxu0
    %v751 = vadd.f32 %v710, %v750
    %v752 = vpop.f32.mrb[0].mxu0
    %v753 = vpop.f32.mrb[0].mxu0
    %754 = vdwg.mxu0
    %755 = vmatprep.subr.bf16.mxu0 0
    %756 = vmatpush1.bf16.msra.mxu0 %v531
    %757 = vmatprep.subr.bf16.mxu0 0
    %758 = vmatpush1.bf16.msra.mxu0 %v534
    %759 = vmatprep.subr.bf16.mxu0 0
    %760 = vmatpush1.bf16.msra.mxu0 %v537
    %761 = vmatprep.subr.bf16.mxu0 0
    %762 = vmatpush1.bf16.msra.mxu0 %v540
    %763 = vmatprep.subr.bf16.mxu0 0
    %764 = vmatpush1.bf16.msra.mxu0 %v543
    %765 = vmatprep.subr.bf16.mxu0 0
    %766 = vmatpush1.bf16.msra.mxu0 %v546
    %767 = vmatprep.subr.bf16.mxu0 0
    %768 = vmatpush1.bf16.msra.mxu0 %v549
    %769 = vmatprep.subr.bf16.mxu0 0
    %770 = vmatpush1.bf16.msra.mxu0 %v552
    %771 = vmatprep.subr.bf16.mxu0 0
    %772 = vmatpush1.bf16.msra.mxu0 %v555
    %773 = vmatprep.subr.bf16.mxu0 0
    %774 = vmatpush1.bf16.msra.mxu0 %v558
    %775 = vmatprep.subr.bf16.mxu0 0
    %776 = vmatpush1.bf16.msra.mxu0 %v561
    %777 = vmatprep.subr.bf16.mxu0 0
    %778 = vmatpush1.bf16.msra.mxu0 %v564
    %779 = vmatprep.subr.bf16.mxu0 0
    %780 = vmatpush1.bf16.msra.mxu0 %v567
    %781 = vmatprep.subr.bf16.mxu0 0
    %782 = vmatpush1.bf16.msra.mxu0 %v570
    %783 = vmatprep.subr.bf16.mxu0 0
    %784 = vmatpush1.bf16.msra.mxu0 %v573
    %785 = vmatprep.subr.bf16.mxu0 0
    %786 = vmatpush1.bf16.msra.mxu0 %v576
    %787 = vmatprep.mubr.bf16.mxu0 %v174
    %788 = vmatmul.mubr.bf16.gmra.mrb[0].mxu0 %v173
    %v789 = vpop.f32.mrb[0].mxu0
    %v790 = vadd.f32 %v285, %v789
    %v791 = vpop.f32.mrb[0].mxu0
    %v792 = vpop.f32.mrb[0].mxu0
    %v793 = vpop.f32.mrb[0].mxu0
    %794 = vdwg.mxu0
    %795 = vmatprep.subr.bf16.mxu0 0
    %796 = vmatpush1.bf16.msra.mxu0 %v579
    %797 = vmatprep.subr.bf16.mxu0 0
    %798 = vmatpush1.bf16.msra.mxu0 %v582
    %799 = vmatprep.subr.bf16.mxu0 0
    %800 = vmatpush1.bf16.msra.mxu0 %v585
    %801 = vmatprep.subr.bf16.mxu0 0
    %802 = vmatpush1.bf16.msra.mxu0 %v588
    %803 = vmatprep.subr.bf16.mxu0 0
    %804 = vmatpush1.bf16.msra.mxu0 %v591
    %805 = vmatprep.subr.bf16.mxu0 0
    %806 = vmatpush1.bf16.msra.mxu0 %v594
    %807 = vmatprep.subr.bf16.mxu0 0
    %808 = vmatpush1.bf16.msra.mxu0 %v597
    %809 = vmatprep.subr.bf16.mxu0 0
    %810 = vmatpush1.bf16.msra.mxu0 %v600
    %811 = vmatprep.subr.bf16.mxu0 0
    %812 = vmatpush1.bf16.msra.mxu0 0
    %813 = vmatprep.subr.bf16.mxu0 0
    %814 = vmatpush1.bf16.msra.mxu0 0
    %815 = vmatprep.subr.bf16.mxu0 0
    %816 = vmatpush1.bf16.msra.mxu0 0
    %817 = vmatprep.subr.bf16.mxu0 0
    %818 = vmatpush1.bf16.msra.mxu0 0
    %819 = vmatprep.subr.bf16.mxu0 0
    %820 = vmatpush1.bf16.msra.mxu0 0
    %821 = vmatprep.subr.bf16.mxu0 0
    %822 = vmatpush1.bf16.msra.mxu0 0
    %823 = vmatprep.subr.bf16.mxu0 0
    %824 = vmatpush1.bf16.msra.mxu0 0
    %825 = vmatprep.subr.bf16.mxu0 0
    %826 = vmatpush1.bf16.msra.mxu0 0
    %827 = vmatprep.mubr.bf16.mxu0 0
    %828 = vmatmul.mubr.bf16.gmra.mrb[0].mxu0 %v175
    %v829 = vpop.f32.mrb[0].mxu0
    %v830 = vadd.f32 %v790, %v829
    %v831 = vpop.f32.mrb[0].mxu0
    %v832 = vpop.f32.mrb[0].mxu0
    %v833 = vpop.f32.mrb[0].mxu0
    %834 = vdwg.mxu0
    %v835 = vmax.f32 %v749, 0.0
    %v836 = vmax.f32 %v751, 0.0
    %v837 = vmax.f32 %v830, 0.0
    %838 = vst [vmem:[#allocation2] sm:$0xff] %v835
    %839 = vst [vmem:[#allocation2 + $0x8] sm:$0xff] %v836
    %840 = vst [vmem:[#allocation2 + $0x10] sm:$0xff] %v837
    // Predicated region
    $region30: #{_forward.1} parent=1 // pred_check
      _
    $region31: #{_forward.1} parent=1 // pred_check_branch
      %842 = sbr.rel (0) target = $region33
    $region32: #{_forward.1} parent=1 // pred_region
      %s844 = ssub.s32 384, 384
      %845 = vsyncadd [#allocation3], %s844
      %s847 = sshll.u32 [#allocation2], 4
      %s848 = int_to_ptr.vmem [resolvable:$true] %s847
      %850 = dma.vmem_to_hbm [thread:$0]  %s848, 384, %s7, [#allocation3]
    $region33: #{_forward.1} parent=1 // pred_fallthru
      _
    // Predicated region
    $region34: #{_forward.1} parent=1 // pred_check
      _
    $region35: #{_forward.1} parent=1 // pred_check_branch
      %852 = sbr.rel (0) target = $region37
    $region36: #{_forward.1} parent=1 // pred_region
      %853 = dma.done [#allocation3], 384
    $region37: #{_forward.1} parent=1 // pred_fallthru
      _
    %854 = vsyncpa [#allocation3], 1

</llo_original>
